<compile_context>
chip_gen: v5e
topology: v5e:2x2
jax: 0.10.0
libtpu: 0.0.40
codegen_flags: <defaults>
</compile_context>

<pallas_src>
import functools

import jax
import jax.numpy as jnp
from jax import lax
from jax.experimental import pallas as pl
from jax.experimental.pallas import tpu as pltpu

_MiB = 1 << 20


def _round_up(x, m):
    return ((x + m - 1) // m) * m


def _gen_params():
    """Per-TPU-generation tiling targets and VMEM budgets."""
    kind = ""
    try:
        kind = jax.devices()[0].device_kind.lower()
    except Exception:
        pass
    if "v7" in kind:
        # 64 MiB VMEM/TC, ~3.2 TB/s HBM: compute-bound already at modest tm; VMEM rules.
        return {"target_tm": 384, "vmem_budget": 44 * _MiB, "vmem_cap": 56 * _MiB}
    if "v6" in kind:
        # 128 MiB VMEM, ~1.4 TB/s HBM: need tm ~ 640+ (bf16 weights) to be MXU-bound.
        return {"target_tm": 768, "vmem_budget": 96 * _MiB, "vmem_cap": 110 * _MiB}
    if "v5" in kind:
        # v5e: 128 MiB VMEM, ~0.82 TB/s HBM.
        return {"target_tm": 512, "vmem_budget": 96 * _MiB, "vmem_cap": 110 * _MiB}
    # Unknown generation: conservative (fits a 64 MiB VMEM floor).
    return {"target_tm": 256, "vmem_budget": 40 * _MiB, "vmem_cap": 56 * _MiB}


def _choose_tn(vocab, tile_cols=None):
    """Pick the vocab tile tn and padded vocab Vp (multiple of tn, >= vocab)."""
    if tile_cols is not None:
        tn = int(tile_cols)
        assert tn % 128 == 0, "tile_cols must be a multiple of 128"
        return tn, _round_up(vocab, tn)
    if vocab <= 1024:
        tn = _round_up(vocab, 128)
        return tn, tn
    for tn in (1024, 512, 256, 128):
        if vocab % tn == 0:
            return tn, vocab              # no padding needed
    # vocab not a multiple of 128 (e.g. 50257): pad to a multiple of 512 (<1% extra)
    tn = 512
    return tn, _round_up(vocab, tn)


def _pick_tm(rows, H, Vp, tn, *, x_item, w_item, out_item, masked, f32_stage,
             target_tm, vmem_budget, user_cap):
    """Largest row tile that fits the VMEM budget (capped by the per-gen target)."""
    per_row = (2 * Vp * out_item                      # double-buffered resident output
               + (4 * Vp if f32_stage else 0)          # optional f32 staging scratch
               + 2 * H * x_item                        # double-buffered x tile
               + (2 * tn if masked else 0)             # int8 mask tiles
               + 16)                                   # m / l accumulators
    fixed = 2 * H * tn * w_item + 2 * _MiB             # weight tiles + compiler slack
    tm_fit = max(8, (vmem_budget - fixed) // per_row)
    tm = min(target_tm, tm_fit, _round_up(rows, 8))
    if user_cap is not None:
        tm = min(tm, user_cap)
    tm = max(8, (tm // 8) * 8)
    if tm >= 256:
        tm = (tm // 128) * 128                         # MXU / layout friendly
    return int(tm)


def _make_kernel(*, num_v_tiles, tile_n, vocab, vocab_p, masked, use_f32_stage):
    needs_vpad = vocab_p != vocab

    def kernel(*refs):
        idx = 0
        x_ref = refs[idx]; idx += 1
        wt_ref = refs[idx]; idx += 1
        mask_ref = None
        if masked:
            mask_ref = refs[idx]; idx += 1
        o_ref = refs[idx]; idx += 1
        m_ref = refs[idx]; idx += 1
        l_ref = refs[idx]; idx += 1
        proj_ref = refs[idx] if use_f32_stage else o_ref

        j = pl.program_id(1)

        @pl.when(j == 0)
        def _init():
            m_ref[...] = jnp.full_like(m_ref, -jnp.inf)
            l_ref[...] = jnp.zeros_like(l_ref)

        # proj tile = x @ W^T  (operands already in mxu_dtype; f32 accumulation)
        p = jnp.dot(x_ref[...], wt_ref[...], preferred_element_type=jnp.float32)
        if masked:
            p = jnp.where(mask_ref[...] != 0, jnp.float32(-100.0), p)
        if needs_vpad:
            # Neutralize vocab padding columns so they don't contribute to the LSE.
            col = j * tile_n + lax.broadcasted_iota(jnp.int32, p.shape, 1)
            p = jnp.where(col >= vocab, jnp.float32(-1e30), p)

        # Stage raw (masked) logits for this V tile.
        if num_v_tiles == 1:
            proj_ref[...] = p.astype(proj_ref.dtype)
        else:
            col0 = pl.multiple_of(j * tile_n, tile_n)
            proj_ref[:, pl.ds(col0, tile_n)] = p.astype(proj_ref.dtype)

        # Online max / sum-exp update.
        m_prev = m_ref[...]
        m_new = jnp.maximum(m_prev, jnp.max(p, axis=-1, keepdims=True))
        l_ref[...] = (
            l_ref[...] * jnp.exp(m_prev - m_new)
            + jnp.sum(jnp.exp(p - m_new), axis=-1, keepdims=True)
        )
        m_ref[...] = m_new

        @pl.when(j == num_v_tiles - 1)
        def _finalize():
            lse = m_ref[...] + jnp.log(l_ref[...])
            o_ref[...] = (proj_ref[...].astype(jnp.float32) - lse).astype(o_ref.dtype)

    return kernel


@functools.partial(
    jax.jit,
    static_argnames=("tile_rows", "tile_cols", "out_dtype", "mxu_dtype", "f32_staging"),
)
def softmax_forward(x, w_t, mask=None, *, tile_rows=None, tile_cols=None,
                    out_dtype=None, mxu_dtype=jnp.bfloat16, f32_staging=False):
    """
    x:    (B, S, H)
    w_t:  (H, V)  -- the PyTorch nn.Linear weight (V, H), pre-transposed ONCE outside.
          For best performance keep it stored in bf16 so no per-call cast is needed.
    mask: optional (B, S, V); nonzero/True entries are filled with -100 before log_softmax.
    Returns (B, S, V) log-probabilities in out_dtype (default: x.dtype).
    """
    B, S, H = x.shape
    Hw, V = w_t.shape
    assert Hw == H, "w_t must be (hidden, vocab) = PyTorch weight transposed"

    out_dtype = jnp.dtype(x.dtype if out_dtype is None else out_dtype)
    mxu_dtype = jnp.dtype(mxu_dtype)
    gen = _gen_params()

    rows = B * S
    tn, Vp = _choose_tn(V, tile_cols)
    nv = Vp // tn

    use_f32_stage = bool(f32_staging) and out_dtype != jnp.dtype(jnp.float32)

    tm = _pick_tm(
        rows, H, Vp, tn,
        x_item=mxu_dtype.itemsize, w_item=mxu_dtype.itemsize,
        out_item=out_dtype.itemsize, masked=(mask is not None),
        f32_stage=use_f32_stage, target_tm=gen["target_tm"],
        vmem_budget=gen["vmem_budget"], user_cap=tile_rows,
    )
    rows_p = _round_up(rows, tm)

    # Operands in MXU dtype (bf16 by default) -> half the weight HBM stream, no
    # per-V-step casts inside the kernel.
    x2 = x.reshape(rows, H)
    if x2.dtype != mxu_dtype:
        x2 = x2.astype(mxu_dtype)
    w = w_t if w_t.dtype == mxu_dtype else w_t.astype(mxu_dtype)
    if rows_p != rows:
        x2 = jnp.pad(x2, ((0, rows_p - rows), (0, 0)))
    if Vp != V:
        w = jnp.pad(w, ((0, 0), (0, Vp - V)))

    in_specs = [
        pl.BlockSpec((tm, H), lambda i, j: (i, 0)),
        pl.BlockSpec((H, tn), lambda i, j: (0, j)),
    ]
    operands = [x2, w]
    if mask is not None:
        mask2 = mask.reshape(rows, V).astype(jnp.int8)     # 1 byte/elem HBM traffic
        if rows_p != rows or Vp != V:
            mask2 = jnp.pad(mask2, ((0, rows_p - rows), (0, Vp - V)))
        in_specs.append(pl.BlockSpec((tm, tn), lambda i, j: (i, j)))
        operands.append(mask2)

    out_specs = pl.BlockSpec((tm, Vp), lambda i, j: (i, 0))
    out_shape = jax.ShapeDtypeStruct((rows_p, Vp), out_dtype)

    scratch_shapes = [
        pltpu.VMEM((tm, 1), jnp.float32),   # running max
        pltpu.VMEM((tm, 1), jnp.float32),   # running sum-exp
    ]
    if use_f32_stage:
        scratch_shapes.append(pltpu.VMEM((tm, Vp), jnp.float32))

    kernel = _make_kernel(
        num_v_tiles=nv, tile_n=tn, vocab=V, vocab_p=Vp,
        masked=(mask is not None), use_f32_stage=use_f32_stage,
    )

    est = (
        2 * tm * H * mxu_dtype.itemsize         # x tiles (double-buffered)
        + 2 * H * tn * mxu_dtype.itemsize       # weight tiles (double-buffered)
        + 2 * tm * Vp * out_dtype.itemsize      # resident output blocks
        + (tm * Vp * 4 if use_f32_stage else 0)
        + 8 * tm * 4
        + (2 * tm * tn if mask is not None else 0)
    )
    vmem_limit = int(min(max(int(est * 1.4), 32 * _MiB), gen["vmem_cap"]))

    cost = pl.CostEstimate(
        flops=2 * rows_p * H * Vp,
        transcendentals=rows_p * Vp + rows_p,
        bytes_accessed=(
            x2.size * x2.dtype.itemsize
            + (rows_p // tm) * H * Vp * w.dtype.itemsize
            + (rows_p * Vp if mask is not None else 0)
            + rows_p * Vp * out_dtype.itemsize
        ),
    )

    out = pl.pallas_call(
        kernel,
        out_shape=out_shape,
        grid_spec=pltpu.PrefetchScalarGridSpec(
            num_scalar_prefetch=0,
            grid=(rows_p // tm, nv),
            in_specs=in_specs,
            out_specs=out_specs,
            scratch_shapes=scratch_shapes,
        ),
        compiler_params=pltpu.CompilerParams(
            dimension_semantics=("parallel", "arbitrary"),
            vmem_limit_bytes=vmem_limit,
        ),
        cost_estimate=cost,
    )(*operands)

    return out[:rows, :V].reshape(B, S, V)


def _reference(x, weight, mask=None):
    proj = jnp.einsum(
        "bsh,vh->bsv", x.astype(jnp.float32), weight.astype(jnp.float32)
    )
    if mask is not None:
        proj = jnp.where(mask, jnp.float32(-100.0), proj)
    return jax.nn.log_softmax(proj, axis=-1)


if __name__ == "__main__":
    batch, seq, hidden, vocab = 2, 8, 32, 256

    key = jax.random.PRNGKey(0)
    kx, kw, km, kx2, kw2 = jax.random.split(key, 5)

    x = jax.random.normal(kx, (batch, seq, hidden), dtype=jnp.float32)
    # PyTorch nn.Linear(hidden, vocab, bias=False) weight convention: (vocab, hidden)
    bound = 1.0 / (hidden ** 0.5)
    weight = jax.random.uniform(
        kw, (vocab, hidden), dtype=jnp.float32, minval=-bound, maxval=bound
    )
    w_t = jnp.asarray(weight.T)  # transpose ONCE, outside the jitted kernel call
    mask = jax.random.bernoulli(km, p=0.1, shape=(batch, seq, vocab))

    # 1) Unmasked, f32 MXU operands (tight numerical check), single V tile.
    out = jax.block_until_ready(softmax_forward(x, w_t, None, mxu_dtype=jnp.float32))
    ref = _reference(x, weight, None)
    assert out.shape == (batch, seq, vocab)
    assert jnp.allclose(out.astype(jnp.float32), ref, atol=1e-4, rtol=0)

    # 2) Masked, f32 MXU operands, forced V tiling (exercises online LSE across tiles).
    out_m = jax.block_until_ready(
        softmax_forward(x, w_t, mask, mxu_dtype=jnp.float32, tile_cols=128)
    )
    ref_m = _reference(x, weight, mask)
    assert jnp.allclose(out_m.astype(jnp.float32), ref_m, atol=1e-4, rtol=0)

    # 3) Masked, default bf16 MXU fast path, bf16 output staged in the output block.
    out_bf = jax.block_until_ready(
        softmax_forward(x, w_t, mask, out_dtype=jnp.bfloat16)
    )
    assert out_bf.dtype == jnp.bfloat16
    assert jnp.allclose(out_bf.astype(jnp.float32), ref_m, atol=5e-2, rtol=1e-2)

    # 4) bf16 output with the optional f32 staging scratch path.
    out_b16 = jax.block_until_ready(
        softmax_forward(x, w_t, None, out_dtype=jnp.bfloat16, f32_staging=True)
    )
    assert jnp.allclose(out_b16.astype(jnp.float32), ref, atol=5e-2, rtol=1e-2)

    # 5) Multiple row tiles + row padding (B*S not a multiple of the row tile).
    x_odd = jax.random.normal(kx2, (batch, 5, hidden), dtype=jnp.float32)
    out_odd = jax.block_until_ready(
        softmax_forward(x_odd, w_t, None, tile_rows=8, mxu_dtype=jnp.float32)
    )
    ref_odd = _reference(x_odd, weight, None)
    assert out_odd.shape == (batch, 5, vocab)
    assert jnp.allclose(out_odd.astype(jnp.float32), ref_odd, atol=1e-4, rtol=0)

    # 6) Vocab not a multiple of 128 (exercises vocab padding + pad-column masking).
    vocab2 = 200
    weight2 = jax.random.uniform(
        kw2, (vocab2, hidden), dtype=jnp.float32, minval=-bound, maxval=bound
    )
    out_v = jax.block_until_ready(
        softmax_forward(x, jnp.asarray(weight2.T), None, mxu_dtype=jnp.float32)
    )
    ref_v = _reference(x, weight2, None)
    assert out_v.shape == (batch, seq, vocab2)
    assert jnp.allclose(out_v.astype(jnp.float32), ref_v, atol=1e-4, rtol=0)

    print("KERNEL_OK")
</pallas_src>

<mosaic_0001>
module attributes {stable_mosaic.version = 11 : i64} {
  func.func @kernel(%arg0: i32, %arg1: i32, %arg2: memref<16x32xf32, #tpu.memory_space<vmem>>, %arg3: memref<32x256xf32, #tpu.memory_space<vmem>>, %arg4: memref<16x256xf32, #tpu.memory_space<vmem>>, %arg5: memref<16x1xf32, #tpu.memory_space<vmem>>, %arg6: memref<16x1xf32, #tpu.memory_space<vmem>>) attributes {dimension_semantics = [#tpu.dimension_semantics<parallel>, #tpu.dimension_semantics<arbitrary>], iteration_bounds = array<i64: 1, 1>, scalar_prefetch = 0 : i64, scratch_operands = 2 : i64, tpu.core_type = #tpu.core_type<tc>, window_params = [{transform_indices = @transform_0, window_bounds = array<i64: 16, 32>}, {transform_indices = @transform_1, window_bounds = array<i64: 32, 256>}, {transform_indices = @transform_2, window_bounds = array<i64: 16, 256>}]} {
    %c0_i32 = arith.constant 0 : i32
    %0 = arith.cmpi eq, %arg1, %c0_i32 : i32
    %1 = arith.extui %0 : i1 to i32
    %c0_i32_0 = arith.constant 0 : i32
    %2 = arith.cmpi ne, %1, %c0_i32_0 : i32
    scf.if %2 {
      %cst_18 = arith.constant 0xFF800000 : f32
      %26 = vector.broadcast %cst_18 : f32 to vector<16x1xf32>
      %c0_19 = arith.constant 0 : index
      %c0_20 = arith.constant 0 : index
      %27 = vector.load %arg5[%c0_19, %c0_20] : memref<16x1xf32, #tpu.memory_space<vmem>>, vector<16x1xf32>
      tpu.vector_store %arg5[%c0_19, %c0_20], %26 {strides = array<i32>} : memref<16x1xf32, #tpu.memory_space<vmem>>, vector<16x1xf32>,
      %cst_21 = arith.constant 0.000000e+00 : f32
      %28 = vector.broadcast %cst_21 : f32 to vector<16x1xf32>
      %c0_22 = arith.constant 0 : index
      %c0_23 = arith.constant 0 : index
      %29 = vector.load %arg6[%c0_22, %c0_23] : memref<16x1xf32, #tpu.memory_space<vmem>>, vector<16x1xf32>
      tpu.vector_store %arg6[%c0_22, %c0_23], %28 {strides = array<i32>} : memref<16x1xf32, #tpu.memory_space<vmem>>, vector<16x1xf32>,
    } else {
    }
    %c0 = arith.constant 0 : index
    %c0_1 = arith.constant 0 : index
    %3 = vector.load %arg2[%c0, %c0_1] : memref<16x32xf32, #tpu.memory_space<vmem>>, vector<16x32xf32>
    %c0_2 = arith.constant 0 : index
    %c0_3 = arith.constant 0 : index
    %4 = vector.load %arg3[%c0_2, %c0_3] : memref<32x256xf32, #tpu.memory_space<vmem>>, vector<32x256xf32>
    %cst = arith.constant dense<0.000000e+00> : vector<16x256xf32>
    %5 = tpu.matmul %3, %4, %cst {dimension_numbers = #tpu.dot_dimension_numbers<[1], [0], [0], [1], [0, 0, 1, 1], [], []>} : vector<16x32xf32>, vector<32x256xf32>, vector<16x256xf32> -> vector<16x256xf32>
    %c0_4 = arith.constant 0 : index
    %c0_5 = arith.constant 0 : index
    %6 = vector.load %arg4[%c0_4, %c0_5] : memref<16x256xf32, #tpu.memory_space<vmem>>, vector<16x256xf32>
    tpu.vector_store %arg4[%c0_4, %c0_5], %5 {strides = array<i32>} : memref<16x256xf32, #tpu.memory_space<vmem>>, vector<16x256xf32>,
    %c0_6 = arith.constant 0 : index
    %c0_7 = arith.constant 0 : index
    %7 = vector.load %arg5[%c0_6, %c0_7] : memref<16x1xf32, #tpu.memory_space<vmem>>, vector<16x1xf32>
    %cst_8 = arith.constant dense<0xFF800000> : vector<16xf32>
    %8 = vector.multi_reduction <maximumf>, %5, %cst_8 [1] : vector<16x256xf32> to vector<16xf32>
    %9 = vector.shape_cast %8 : vector<16xf32> to vector<16x1xf32>
    %10 = arith.maximumf %7, %9 : vector<16x1xf32>
    %c0_9 = arith.constant 0 : index
    %c0_10 = arith.constant 0 : index
    %11 = vector.load %arg6[%c0_9, %c0_10] : memref<16x1xf32, #tpu.memory_space<vmem>>, vector<16x1xf32>
    %12 = arith.subf %7, %10 : vector<16x1xf32>
    %13 = math.exp %12 : vector<16x1xf32>
    %14 = arith.mulf %11, %13 : vector<16x1xf32>
    %15 = vector.broadcast %10 : vector<16x1xf32> to vector<16x256xf32>
    %16 = arith.subf %5, %15 : vector<16x256xf32>
    %17 = math.exp %16 : vector<16x256xf32>
    %cst_11 = arith.constant dense<0.000000e+00> : vector<16xf32>
    %18 = vector.multi_reduction <add>, %17, %cst_11 [1] : vector<16x256xf32> to vector<16xf32>
    %19 = vector.shape_cast %18 : vector<16xf32> to vector<16x1xf32>
    %20 = arith.addf %14, %19 : vector<16x1xf32>
    %c0_12 = arith.constant 0 : index
    %c0_13 = arith.constant 0 : index
    %21 = vector.load %arg6[%c0_12, %c0_13] : memref<16x1xf32, #tpu.memory_space<vmem>>, vector<16x1xf32>
    tpu.vector_store %arg6[%c0_12, %c0_13], %20 {strides = array<i32>} : memref<16x1xf32, #tpu.memory_space<vmem>>, vector<16x1xf32>,
    %c0_14 = arith.constant 0 : index
    %c0_15 = arith.constant 0 : index
    %22 = vector.load %arg5[%c0_14, %c0_15] : memref<16x1xf32, #tpu.memory_space<vmem>>, vector<16x1xf32>
    tpu.vector_store %arg5[%c0_14, %c0_15], %10 {strides = array<i32>} : memref<16x1xf32, #tpu.memory_space<vmem>>, vector<16x1xf32>,
    %c0_i32_16 = arith.constant 0 : i32
    %23 = arith.cmpi eq, %arg1, %c0_i32_16 : i32
    %24 = arith.extui %23 : i1 to i32
    %c0_i32_17 = arith.constant 0 : i32
    %25 = arith.cmpi ne, %24, %c0_i32_17 : i32
    scf.if %25 {
      %c0_18 = arith.constant 0 : index
      %c0_19 = arith.constant 0 : index
      %26 = vector.load %arg5[%c0_18, %c0_19] : memref<16x1xf32, #tpu.memory_space<vmem>>, vector<16x1xf32>
      %c0_20 = arith.constant 0 : index
      %c0_21 = arith.constant 0 : index
      %27 = vector.load %arg6[%c0_20, %c0_21] : memref<16x1xf32, #tpu.memory_space<vmem>>, vector<16x1xf32>
      %28 = math.log %27 : vector<16x1xf32>
      %29 = arith.addf %26, %28 : vector<16x1xf32>
      %c0_22 = arith.constant 0 : index
      %c0_23 = arith.constant 0 : index
      %30 = vector.load %arg4[%c0_22, %c0_23] : memref<16x256xf32, #tpu.memory_space<vmem>>, vector<16x256xf32>
      %31 = vector.broadcast %29 : vector<16x1xf32> to vector<16x256xf32>
      %32 = arith.subf %30, %31 : vector<16x256xf32>
      %c0_24 = arith.constant 0 : index
      %c0_25 = arith.constant 0 : index
      %33 = vector.load %arg4[%c0_24, %c0_25] : memref<16x256xf32, #tpu.memory_space<vmem>>, vector<16x256xf32>
      tpu.vector_store %arg4[%c0_24, %c0_25], %32 {strides = array<i32>} : memref<16x256xf32, #tpu.memory_space<vmem>>, vector<16x256xf32>,
    } else {
    }
    return
  }
  func.func @transform_0(%arg0: i32, %arg1: i32) -> (i32, i32) {
    %c0_i32 = arith.constant 0 : i32
    %c0_i32_0 = arith.constant 0 : i32
    return %arg0, %c0_i32 : i32, i32
  }
  func.func @transform_1(%arg0: i32, %arg1: i32) -> (i32, i32) {
    %c0_i32 = arith.constant 0 : i32
    %c0_i32_0 = arith.constant 0 : i32
    return %c0_i32, %arg1 : i32, i32
  }
  func.func @transform_2(%arg0: i32, %arg1: i32) -> (i32, i32) {
    %c0_i32 = arith.constant 0 : i32
    %c0_i32_0 = arith.constant 0 : i32
    return %arg0, %c0_i32 : i32, i32
  }
}

</mosaic_0001>

<llo_original>
// kernel: softmax_forward.1
$region0: #{softmax_forward.1}
  #allocation0 [shape = 'u32[]', space=smem, size = 0x4, offset = 0x4, fixed_abs, tag = 'smem constant byte address 0x4 - core index']
  #allocation1 [shape = 'u32[72,128]{1,0:T(1,128)}', space=vmem, size = 0x9000, scoped, tag = 'internal scratch']
  #allocation2 [shape = 'f32[16,1]{1,0:T(8,128)}', space=vmem, size = 0x2000, scoped, tag = 'scratch operand']
  #allocation3 [shape = 'f32[16,1]{1,0:T(8,128)}', space=vmem, size = 0x2000, scoped, tag = 'scratch operand']
  %s0 = inlined_call_operand.hbm [shape: f32[16,32], index: 0, kind: input, shape index: {}]
  %s1 = inlined_call_operand.hbm [shape: f32[32,256], index: 1, kind: input, shape index: {}]
  %s2 = inlined_call_operand.hbm [shape: f32[16,256], index: 2, kind: output, shape index: {}]
  %s3 = sld [smem:[#allocation0]]
  $region34: #{softmax_forward.1} parent=0
    _
  %s5 = ssub.s32 1, %s3
  %s6 = scalar_select 0, %s5, %s3
  $region1: #{softmax_forward.1} parent=0
    #allocation4 [shape = 'u8[8192]{0}', space=vmem, size = 0x2000, scoped, tag = 'input window, operand 0, single buffered']
    #allocation5 [shape = 's32[1]{0}', space=sflag, size = 0x4, scoped, tag = 'scoped memory for softmax_forward.1']
    #allocation6 [shape = 's32[1]{0}', space=sflag, size = 0x4, scoped, tag = 'scoped memory for softmax_forward.1']
    #allocation7 [shape = 'u8[32768]{0}', space=vmem, size = 0x8000, scoped, tag = 'input window, operand 1, single buffered']
    #allocation8 [shape = 's32[1]{0}', space=sflag, size = 0x4, scoped, tag = 'scoped memory for softmax_forward.1']
    #allocation9 [shape = 'u8[16384]{0}', space=vmem, size = 0x4000, scoped, tag = 'output window, operand 0, single buffered']
    %7 = vsyncpa [#allocation5], 0
    %8 = vsyncpa [#allocation8], 0
    %9 = vsyncpa [#allocation6], 0
    // Predicated region
    $region2: #{softmax_forward.1} parent=1 // pred_check
      _
    $region3: #{softmax_forward.1} parent=1 // pred_check_branch
      %11 = sbr.rel (0) target = $region5
    $region4: #{softmax_forward.1} parent=1 // pred_region
      %13 = vsyncadd [#allocation5], 0
      %s14 = sshll.u32 %s0, 4
      %s15 = int_to_ptr.hbm [resolvable:$true] %s14
      %s16 = sshll.u32 [#allocation4], 4
      %s17 = int_to_ptr.vmem [resolvable:$true] %s16
      %22 = dma.hbm_to_vmem [thread:$0]  %s15, 256, %s17, [#allocation5], 128, 128, 8
    $region5: #{softmax_forward.1} parent=1 // pred_fallthru
      _
    // Predicated region
    $region6: #{softmax_forward.1} parent=1 // pred_check
      _
    $region7: #{softmax_forward.1} parent=1 // pred_check_branch
      %24 = sbr.rel (0) target = $region9
    $region8: #{softmax_forward.1} parent=1 // pred_region
      %26 = vsyncadd [#allocation8], 0
      %s27 = sshll.u32 %s1, 4
      %s28 = int_to_ptr.hbm [resolvable:$true] %s27
      %s29 = sshll.u32 [#allocation7], 4
      %s30 = int_to_ptr.vmem [resolvable:$true] %s29
      %35 = dma.hbm_to_vmem [thread:$0]  %s28, 1024, %s30, [#allocation8], 256, 256, 16
    $region9: #{softmax_forward.1} parent=1 // pred_fallthru
      _
    // Predicated region
    $region10: #{softmax_forward.1} parent=1 // pred_check
      _
    $region11: #{softmax_forward.1} parent=1 // pred_check_branch
      %37 = sbr.rel (0) target = $region13
    $region12: #{softmax_forward.1} parent=1 // pred_region
      %39 = dma.done [#allocation5], 256
    $region13: #{softmax_forward.1} parent=1 // pred_fallthru
      _
    // Predicated region
    $region14: #{softmax_forward.1} parent=1 // pred_check
      _
    $region15: #{softmax_forward.1} parent=1 // pred_check_branch
      %41 = sbr.rel (0) target = $region17
    $region16: #{softmax_forward.1} parent=1 // pred_region
      %43 = dma.done [#allocation8], 1024
    $region17: #{softmax_forward.1} parent=1 // pred_fallthru
      _
    %p44 = scmp.eq.s32.totalorder 0, 0
    // Predicated region
    $region18: #{softmax_forward.1} parent=1 // pred_check
      %p45 = pneg %p44
    $region19: #{softmax_forward.1} parent=1 // pred_check_branch
      %47 = sbr.rel (%p45) target = $region21
    $region20: #{softmax_forward.1} parent=1 // pred_region
      %vm48 = vcmask 7168
      %49 = vst.msk [vmem:[#allocation2] sm:$0xff] %vm48, -inf
      %50 = vst.msk [vmem:[#allocation2 + $0x8] sm:$0xff] %vm48, -inf
      %51 = vst.msk [vmem:[#allocation3] sm:$0xff] %vm48, 0.0
      %52 = vst.msk [vmem:[#allocation3 + $0x8] sm:$0xff] %vm48, 0.0
    $region21: #{softmax_forward.1} parent=1 // pred_fallthru
      _
    %v53 = vld [vmem:[#allocation4] sm:$0xff]
    %v54 = vld [vmem:[#allocation4 + $0x8] sm:$0xff]
    %v55 = vld [vmem:[#allocation7] sm:$0xff]
    %v56 = vld [vmem:[#allocation7 + $0x8] sm:$0xff]
    %v57 = vld [vmem:[#allocation7 + $0x10] sm:$0xff]
    %v58 = vld [vmem:[#allocation7 + $0x18] sm:$0xff]
    %v59 = vld [vmem:[#allocation7 + $0x20] sm:$0xff]
    %v60 = vld [vmem:[#allocation7 + $0x28] sm:$0xff]
    %v61 = vld [vmem:[#allocation7 + $0x30] sm:$0xff]
    %v62 = vld [vmem:[#allocation7 + $0x38] sm:$0xff]
    %vm63 = vcmask 261120
    %v65 = vsel %vm63, %v53, 0
    %v68 = vsel %vm63, %v54, 0
    %70 = vmatpush.msra.mxu0 0.0
    %71 = vmatpush.msra.mxu0 0.0
    %72 = vmatpush.msra.mxu0 0.0
    %73 = vmatpush.msra.mxu0 0.0
    %74 = vmatpush.msra.mxu0 0.0
    %75 = vmatpush.msra.mxu0 0.0
    %76 = vmatpush.msra.mxu0 0.0
    %77 = vmatpush.msra.mxu0 0.0
    %78 = vmatpush.msra.mxu0 0.0
    %79 = vmatpush.msra.mxu0 0.0
    %80 = vmatpush.msra.mxu0 0.0
    %81 = vmatpush.msra.mxu0 0.0
    %82 = vmatpush.msra.mxu0 %v61
    %83 = vmatpush.msra.mxu0 %v59
    %84 = vmatpush.msra.mxu0 %v57
    %85 = vmatpush.msra.mxu0 %v55
    %86 = vmatmul.f32.gmra.mxu0 %v65
    %v87 = vpop.f32.mrf.mxu0
    %v88 = vadd.f32 0.0, %v87
    %89 = vmatmul.f32.gmra.mxu0 %v68
    %v90 = vpop.f32.mrf.mxu0
    %v91 = vadd.f32 0.0, %v90
    %92 = vdwg.mxu0
    %93 = vmatpush.msra.mxu0 0.0
    %94 = vmatpush.msra.mxu0 0.0
    %95 = vmatpush.msra.mxu0 0.0
    %96 = vmatpush.msra.mxu0 0.0
    %97 = vmatpush.msra.mxu0 0.0
    %98 = vmatpush.msra.mxu0 0.0
    %99 = vmatpush.msra.mxu0 0.0
    %100 = vmatpush.msra.mxu0 0.0
    %101 = vmatpush.msra.mxu0 0.0
    %102 = vmatpush.msra.mxu0 0.0
    %103 = vmatpush.msra.mxu0 0.0
    %104 = vmatpush.msra.mxu0 0.0
    %105 = vmatpush.msra.mxu0 %v62
    %106 = vmatpush.msra.mxu0 %v60
    %107 = vmatpush.msra.mxu0 %v58
    %108 = vmatpush.msra.mxu0 %v56
    %109 = vmatmul.f32.gmra.mxu0 %v65
    %v110 = vpop.f32.mrf.mxu0
    %v111 = vadd.f32 0.0, %v110
    %112 = vmatmul.f32.gmra.mxu0 %v68
    %v113 = vpop.f32.mrf.mxu0
    %v114 = vadd.f32 0.0, %v113
    %115 = vdwg.mxu0
    %116 = vst [vmem:[#allocation9] sm:$0xff] %v88
    %117 = vst [vmem:[#allocation9 + $0x8] sm:$0xff] %v111
    %118 = vst [vmem:[#allocation9 + $0x10] sm:$0xff] %v91
    %119 = vst [vmem:[#allocation9 + $0x18] sm:$0xff] %v114
    %v120 = vld [vmem:[#allocation2] sm:$0xff]
    %v121 = vld [vmem:[#allocation2 + $0x8] sm:$0xff]
    %v122 = vmax.f32 %v88, %v111
    %123 = vmax.xlane.f32.xlu0 %v122
    %v124 = vpop.xlane.xlu0 %123
    %v125 = vmax.f32 %v91, %v114
    %126 = vmax.xlane.f32.xlu0 %v125
    %v127 = vpop.xlane.xlu0 %126
    %v128 = vmax.f32 %v120, %v124
    %v129 = vmax.f32 %v121, %v127
    %v130 = vld [vmem:[#allocation3] sm:$0xff]
    %v131 = vld [vmem:[#allocation3 + $0x8] sm:$0xff]
    %v132 = vsub.f32 %v120, %v128
    %v133 = vsub.f32 %v121, %v129
    %v134 = vmul.f32 %v132, 1.442695
    %v135 = vpow.pop %v134
    %v136 = vmul.f32 %v133, 1.442695
    %v137 = vpow.pop %v136
    %v138 = vmul.f32 %v130, %v135
    %v139 = vmul.f32 %v131, %v137
    %141 = vset.pattern.permute.xlu0 0
    %142 = vperm.xlu0 %141, %v128
    %v143 = vpop.permute.xlu0 %142
    %146 = vset.pattern.permute.xlu0 0
    %147 = vperm.xlu0 %146, %v129
    %v148 = vpop.permute.xlu0 %147
    %v150 = vsub.f32 %v88, %v143
    %v151 = vsub.f32 %v111, %v143
    %v152 = vsub.f32 %v91, %v148
    %v153 = vsub.f32 %v114, %v148
    %v154 = vmul.f32 %v150, 1.442695
    %v155 = vpow.pop %v154
    %v156 = vmul.f32 %v151, 1.442695
    %v157 = vpow.pop %v156
    %v158 = vmul.f32 %v152, 1.442695
    %v159 = vpow.pop %v158
    %v160 = vmul.f32 %v153, 1.442695
    %v161 = vpow.pop %v160
    %v162 = vadd.f32 %v155, %v157
    %163 = vadd.xlane.f32.xlu0 %v162
    %v164 = vpop.xlane.xlu0 %163
    %v165 = vadd.f32 %v159, %v161
    %166 = vadd.xlane.f32.xlu0 %v165
    %v167 = vpop.xlane.xlu0 %166
    %v168 = vadd.f32 %v138, %v164
    %v169 = vadd.f32 %v139, %v167
    %vm170 = vcmask 7168
    %171 = vst.msk [vmem:[#allocation3] sm:$0xff] %vm170, %v168
    %172 = vst.msk [vmem:[#allocation3 + $0x8] sm:$0xff] %vm170, %v169
    %173 = vst.msk [vmem:[#allocation2] sm:$0xff] %vm170, %v128
    %174 = vst.msk [vmem:[#allocation2 + $0x8] sm:$0xff] %vm170, %v129
    // Predicated region
    $region22: #{softmax_forward.1} parent=1 // pred_check
      %p175 = pneg %p44
    $region23: #{softmax_forward.1} parent=1 // pred_check_branch
      %177 = sbr.rel (%p175) target = $region25
    $region24: #{softmax_forward.1} parent=1 // pred_region
      %v178 = vld [vmem:[#allocation2] sm:$0xff]
      %v179 = vld [vmem:[#allocation2 + $0x8] sm:$0xff]
      %v180 = vld [vmem:[#allocation3] sm:$0xff]
      %v181 = vld [vmem:[#allocation3 + $0x8] sm:$0xff]
      %v182 = vlog2.pop %v180
      %v183 = vmul.f32 %v182, 0.6931472
      %v184 = vlog2.pop %v181
      %v185 = vmul.f32 %v184, 0.6931472
      %v186 = vadd.f32 %v178, %v183
      %v187 = vadd.f32 %v179, %v185
      %v188 = vld [vmem:[#allocation9] sm:$0xff]
      %v189 = vld [vmem:[#allocation9 + $0x8] sm:$0xff]
      %v190 = vld [vmem:[#allocation9 + $0x10] sm:$0xff]
      %v191 = vld [vmem:[#allocation9 + $0x18] sm:$0xff]
      %193 = vset.pattern.permute.xlu0 0
      %194 = vperm.xlu0 %193, %v186
      %v195 = vpop.permute.xlu0 %194
      %198 = vset.pattern.permute.xlu0 0
      %199 = vperm.xlu0 %198, %v187
      %v200 = vpop.permute.xlu0 %199
      %v202 = vsub.f32 %v188, %v195
      %v203 = vsub.f32 %v189, %v195
      %v204 = vsub.f32 %v190, %v200
      %v205 = vsub.f32 %v191, %v200
      %206 = vst [vmem:[#allocation9] sm:$0xff] %v202
      %207 = vst [vmem:[#allocation9 + $0x8] sm:$0xff] %v203
      %208 = vst [vmem:[#allocation9 + $0x10] sm:$0xff] %v204
      %209 = vst [vmem:[#allocation9 + $0x18] sm:$0xff] %v205
    $region25: #{softmax_forward.1} parent=1 // pred_fallthru
      _
    // Predicated region
    $region26: #{softmax_forward.1} parent=1 // pred_check
      _
    $region27: #{softmax_forward.1} parent=1 // pred_check_branch
      %211 = sbr.rel (0) target = $region29
    $region28: #{softmax_forward.1} parent=1 // pred_region
      %213 = vsyncadd [#allocation6], 0
      %s214 = sshll.u32 [#allocation9], 4
      %s215 = int_to_ptr.vmem [resolvable:$true] %s214
      %s216 = sshll.u32 %s2, 4
      %s217 = int_to_ptr.hbm [resolvable:$true] %s216
      %222 = dma.vmem_to_hbm [thread:$0]  %s215, 512, %s217, [#allocation6], 256, 256, 16
    $region29: #{softmax_forward.1} parent=1 // pred_fallthru
      _
    // Predicated region
    $region30: #{softmax_forward.1} parent=1 // pred_check
      _
    $region31: #{softmax_forward.1} parent=1 // pred_check_branch
      %224 = sbr.rel (0) target = $region33
    $region32: #{softmax_forward.1} parent=1 // pred_region
      %226 = dma.done [#allocation6], 512
    $region33: #{softmax_forward.1} parent=1 // pred_fallthru
      _
    %227 = vsyncpa [#allocation5], 1
    %228 = vsyncpa [#allocation8], 1
    %229 = vsyncpa [#allocation6], 1

</llo_original>
